<compile_context>
chip_gen: v6e
topology: v6e:2x2x1
jax: 0.10.0
libtpu: 0.0.40
codegen_flags: <defaults>
</compile_context>

<pallas_src>
import functools
import math

import jax
import jax.numpy as jnp
from jax import lax
from jax.experimental import pallas as pl
from jax.experimental.pallas import tpu as pltpu


def _round_up(x, m):
    return ((x + m - 1) // m) * m


def _cb_loss_kernel(x_ref, t_ref, o_ref, count_ref, nllsum_ref, *, beta):
    step = pl.program_id(0)

    @pl.when(step == 0)
    def _init():
        count_ref[...] = jnp.zeros_like(count_ref)
        nllsum_ref[...] = jnp.zeros_like(nllsum_ref)

    logits = x_ref[...].astype(jnp.float32)           # (TILE_N, C_pad)
    tgt = t_ref[...]                                  # (TILE_N, 1) int32; -1 = padded row
    tile_n, c_pad = logits.shape

    # one-hot via broadcasted iota over the class (lane) axis.
    # padded rows (tgt == -1) and padded classes get all-zero rows/columns.
    class_ids = lax.broadcasted_iota(jnp.int32, (tile_n, c_pad), 1)
    onehot = (tgt == class_ids).astype(jnp.float32)   # (TILE_N, C_pad)

    # per-sample NLL without materializing log-softmax:
    #   nll_i = (m_i + log sum_j exp(x_ij - m_i)) - x_{i, y_i}
    m = jnp.max(logits, axis=1, keepdims=True)                          # (TILE_N, 1)
    lse = jnp.log(jnp.sum(jnp.exp(logits - m), axis=1, keepdims=True))  # (TILE_N, 1)
    x_y = jnp.sum(onehot * logits, axis=1, keepdims=True)               # (TILE_N, 1)
    nll = (m + lse) - x_y                                               # (TILE_N, 1)

    # per-class accumulators (padded rows contribute nothing: onehot row is 0)
    count_ref[...] += jnp.sum(onehot, axis=0, keepdims=True)            # (1, C_pad)
    nllsum_ref[...] += jnp.sum(onehot * nll, axis=0, keepdims=True)     # (1, C_pad)

    @pl.when(step == pl.num_programs(0) - 1)
    def _finalize():
        counts = count_ref[...]                       # (1, C_pad)
        total = jnp.sum(counts)
        freqs = counts / total
        # (1 - beta^freq) / (1 - beta); zero-count (incl. padded) classes -> weight 0
        log_beta = math.log(beta)
        w = (1.0 - jnp.exp(freqs * log_beta)) / (1.0 - beta)
        w = w / jnp.sum(w)
        num = jnp.sum(w * nllsum_ref[...])            # sum_i w[y_i] * nll_i
        den = jnp.sum(w * counts)                     # sum_i w[y_i]
        o_ref[0, 0] = num / den


def class_balanced_loss(logits, target, beta=0.95, tile_n=None):
    n, c = logits.shape
    c_pad = _round_up(max(c, 128), 128)               # lane-dense class axis
    dtype_bytes = jnp.dtype(logits.dtype).itemsize

    # TODO(synk): on v7x a leading 2-wide "parallel" axis with per-core partial
    # accumulators would use both TensorCores; this version keeps a single-core
    # sequential reduction over N.
    if tile_n is None:
        # keep each double-buffered logits tile under ~12 MiB (2x = 24 MiB), safe
        # within the scoped VMEM budget on v5e/v6e and the 64 MiB physical on v7x.
        per_buf_budget = 12 * 1024 * 1024
        tile_n = per_buf_budget // (c_pad * dtype_bytes)
        tile_n = max(8, min(1024, int(tile_n)))
    tile_n = max(8, (int(tile_n) // 8) * 8)
    tile_n = min(tile_n, _round_up(n, 8))
    n_pad = _round_up(n, tile_n)

    # pad: classes with a large FINITE negative (never -inf -> 0*inf NaN),
    # rows with target -1 (all-zero one-hot => no contribution).
    x = logits
    if (n_pad, c_pad) != (n, c):
        x = jnp.pad(x, ((0, n_pad - n), (0, c_pad - c)), constant_values=-1e30)
    t = target.astype(jnp.int32)
    if n_pad != n:
        t = jnp.pad(t, (0, n_pad - n), constant_values=-1)
    t = t.reshape(n_pad, 1)

    grid = (n_pad // tile_n,)

    # explicit scoped-VMEM budget from actual tile bytes (double-buffered inputs)
    logits_tile_bytes = tile_n * c_pad * dtype_bytes
    tgt_tile_bytes = tile_n * 128 * 4                 # (TILE_N,1) int32 pads lanes to 128
    scratch_bytes = 2 * 8 * c_pad * 4
    needed = 2 * logits_tile_bytes + 2 * tgt_tile_bytes + scratch_bytes + (2 << 20)
    vmem_limit = int(min(48 * 1024 * 1024, max(needed, 16 * 1024 * 1024)))

    out = pl.pallas_call(
        functools.partial(_cb_loss_kernel, beta=float(beta)),
        out_shape=jax.ShapeDtypeStruct((1, 1), jnp.float32),
        grid_spec=pltpu.PrefetchScalarGridSpec(
            num_scalar_prefetch=0,
            grid=grid,
            in_specs=[
                pl.BlockSpec((tile_n, c_pad), lambda i: (i, 0)),
                pl.BlockSpec((tile_n, 1), lambda i: (i, 0)),
            ],
            out_specs=pl.BlockSpec(memory_space=pltpu.MemorySpace.SMEM),
            scratch_shapes=[
                pltpu.VMEM((1, c_pad), jnp.float32),   # per-class counts
                pltpu.VMEM((1, c_pad), jnp.float32),   # per-class NLL sums
            ],
        ),
        compiler_params=pltpu.CompilerParams(
            dimension_semantics=("arbitrary",),
            vmem_limit_bytes=vmem_limit,
        ),
    )(x, t)
    return out[0, 0]


def _reference_loss(logits, target, beta=0.95):
    # pure-JAX reference mirroring the PyTorch module, for a correctness check
    n, c = logits.shape
    onehot = jax.nn.one_hot(target, c, dtype=jnp.float32)
    counts = onehot.sum(axis=0)
    freqs = counts / counts.sum()
    w = (1.0 - beta ** freqs) / (1.0 - beta)
    w = w / w.sum()
    logp = jax.nn.log_softmax(logits.astype(jnp.float32), axis=1)
    nll = -(onehot * logp).sum(axis=1)
    wi = onehot @ w
    return (wi * nll).sum() / wi.sum()


if __name__ == "__main__":
    key = jax.random.PRNGKey(0)
    k1, k2, k3, k4 = jax.random.split(key, 4)

    # case 1: single tile, exercises class padding (8 -> 128) and row padding (19 -> 24)
    N1, C1 = 19, 8
    x1 = jax.random.normal(k1, (N1, C1), dtype=jnp.float32)
    t1 = jax.random.randint(k2, (N1,), 0, C1, dtype=jnp.int32)
    loss1 = class_balanced_loss(x1, t1, beta=0.95)
    jax.block_until_ready(loss1)
    ref1 = _reference_loss(x1, t1, beta=0.95)
    assert jnp.allclose(loss1, ref1, rtol=1e-5, atol=1e-5), (loss1, ref1)

    # case 2: multi-tile grid (forced small TILE_N) exercising the cross-step accumulators
    N2, C2 = 100, 10
    x2 = jax.random.normal(k3, (N2, C2), dtype=jnp.float32)
    t2 = jax.random.randint(k4, (N2,), 0, C2, dtype=jnp.int32)
    loss2 = class_balanced_loss(x2, t2, beta=0.95, tile_n=16)
    jax.block_until_ready(loss2)
    ref2 = _reference_loss(x2, t2, beta=0.95)
    assert jnp.allclose(loss2, ref2, rtol=1e-5, atol=1e-5), (loss2, ref2)

    # case 3: bf16 logits end-to-end (no wrapper upcast; kernel upcasts per tile)
    x2b = x2.astype(jnp.bfloat16)
    loss3 = class_balanced_loss(x2b, t2, beta=0.95, tile_n=16)
    jax.block_until_ready(loss3)
    ref3 = _reference_loss(x2b.astype(jnp.float32), t2, beta=0.95)
    assert jnp.allclose(loss3, ref3, rtol=5e-3, atol=5e-3), (loss3, ref3)

    print("KERNEL_OK")
</pallas_src>

<mosaic_0001>
module attributes {stable_mosaic.version = 11 : i64} {
  func.func @_cb_loss_kernel(%arg0: i32, %arg1: memref<24x128xf32, #tpu.memory_space<vmem>>, %arg2: memref<24x1xi32, #tpu.memory_space<vmem>>, %arg3: memref<1x1xf32, #tpu.memory_space<smem>>, %arg4: memref<1x128xf32, #tpu.memory_space<vmem>>, %arg5: memref<1x128xf32, #tpu.memory_space<vmem>>) attributes {dimension_semantics = [#tpu.dimension_semantics<arbitrary>], iteration_bounds = array<i64: 1>, scalar_prefetch = 0 : i64, scratch_operands = 2 : i64, tpu.core_type = #tpu.core_type<tc>, window_params = [{transform_indices = @transform_0, window_bounds = array<i64: 24, 128>}, {transform_indices = @transform_1, window_bounds = array<i64: 24, 1>}, {transform_indices = @transform_2, window_bounds = array<i64: 1, 1>}]} {
    %c0_i32 = arith.constant 0 : i32
    %0 = arith.cmpi eq, %arg0, %c0_i32 : i32
    %1 = arith.extui %0 : i1 to i32
    %c0_i32_0 = arith.constant 0 : i32
    %2 = arith.cmpi ne, %1, %c0_i32_0 : i32
    scf.if %2 {
      %cst_18 = arith.constant 0.000000e+00 : f32
      %38 = vector.broadcast %cst_18 : f32 to vector<1x128xf32>
      %c0_19 = arith.constant 0 : index
      %c0_20 = arith.constant 0 : index
      %39 = vector.load %arg4[%c0_19, %c0_20] : memref<1x128xf32, #tpu.memory_space<vmem>>, vector<1x128xf32>
      tpu.vector_store %arg4[%c0_19, %c0_20], %38 {strides = array<i32>} : memref<1x128xf32, #tpu.memory_space<vmem>>, vector<1x128xf32>,
      %cst_21 = arith.constant 0.000000e+00 : f32
      %40 = vector.broadcast %cst_21 : f32 to vector<1x128xf32>
      %c0_22 = arith.constant 0 : index
      %c0_23 = arith.constant 0 : index
      %41 = vector.load %arg5[%c0_22, %c0_23] : memref<1x128xf32, #tpu.memory_space<vmem>>, vector<1x128xf32>
      tpu.vector_store %arg5[%c0_22, %c0_23], %40 {strides = array<i32>} : memref<1x128xf32, #tpu.memory_space<vmem>>, vector<1x128xf32>,
    } else {
    }
    %c0 = arith.constant 0 : index
    %c0_1 = arith.constant 0 : index
    %3 = vector.load %arg1[%c0, %c0_1] : memref<24x128xf32, #tpu.memory_space<vmem>>, vector<24x128xf32>
    %c0_2 = arith.constant 0 : index
    %c0_3 = arith.constant 0 : index
    %4 = vector.load %arg2[%c0_2, %c0_3] : memref<24x1xi32, #tpu.memory_space<vmem>>, vector<24x1xi32>
    %5 = tpu.iota {dimensions = array<i32: 1>} : vector<24x128xi32>
    %6 = vector.broadcast %4 : vector<24x1xi32> to vector<24x128xi32>
    %7 = arith.cmpi eq, %6, %5 : vector<24x128xi32>
    %8 = arith.extui %7 : vector<24x128xi1> to vector<24x128xi32>
    %9 = arith.sitofp %8 : vector<24x128xi32> to vector<24x128xf32>
    %cst = arith.constant dense<0xFF800000> : vector<24xf32>
    %10 = vector.multi_reduction <maximumf>, %3, %cst [1] : vector<24x128xf32> to vector<24xf32>
    %11 = vector.shape_cast %10 : vector<24xf32> to vector<24x1xf32>
    %12 = vector.broadcast %11 : vector<24x1xf32> to vector<24x128xf32>
    %13 = arith.subf %3, %12 : vector<24x128xf32>
    %14 = math.exp %13 : vector<24x128xf32>
    %cst_4 = arith.constant dense<0.000000e+00> : vector<24xf32>
    %15 = vector.multi_reduction <add>, %14, %cst_4 [1] : vector<24x128xf32> to vector<24xf32>
    %16 = vector.shape_cast %15 : vector<24xf32> to vector<24x1xf32>
    %17 = math.log %16 : vector<24x1xf32>
    %18 = arith.mulf %9, %3 : vector<24x128xf32>
    %cst_5 = arith.constant dense<0.000000e+00> : vector<24xf32>
    %19 = vector.multi_reduction <add>, %18, %cst_5 [1] : vector<24x128xf32> to vector<24xf32>
    %20 = vector.shape_cast %19 : vector<24xf32> to vector<24x1xf32>
    %21 = arith.addf %11, %17 : vector<24x1xf32>
    %22 = arith.subf %21, %20 : vector<24x1xf32>
    %c0_6 = arith.constant 0 : index
    %c0_7 = arith.constant 0 : index
    %23 = vector.load %arg4[%c0_6, %c0_7] : memref<1x128xf32, #tpu.memory_space<vmem>>, vector<1x128xf32>
    %cst_8 = arith.constant dense<0.000000e+00> : vector<128xf32>
    %24 = vector.multi_reduction <add>, %9, %cst_8 [0] : vector<24x128xf32> to vector<128xf32>
    %25 = vector.shape_cast %24 : vector<128xf32> to vector<1x128xf32>
    %26 = arith.addf %23, %25 : vector<1x128xf32>
    %c0_9 = arith.constant 0 : index
    %c0_10 = arith.constant 0 : index
    %27 = vector.load %arg4[%c0_9, %c0_10] : memref<1x128xf32, #tpu.memory_space<vmem>>, vector<1x128xf32>
    tpu.vector_store %arg4[%c0_9, %c0_10], %26 {strides = array<i32>} : memref<1x128xf32, #tpu.memory_space<vmem>>, vector<1x128xf32>,
    %c0_11 = arith.constant 0 : index
    %c0_12 = arith.constant 0 : index
    %28 = vector.load %arg5[%c0_11, %c0_12] : memref<1x128xf32, #tpu.memory_space<vmem>>, vector<1x128xf32>
    %29 = vector.broadcast %22 : vector<24x1xf32> to vector<24x128xf32>
    %30 = arith.mulf %9, %29 : vector<24x128xf32>
    %cst_13 = arith.constant dense<0.000000e+00> : vector<128xf32>
    %31 = vector.multi_reduction <add>, %30, %cst_13 [0] : vector<24x128xf32> to vector<128xf32>
    %32 = vector.shape_cast %31 : vector<128xf32> to vector<1x128xf32>
    %33 = arith.addf %28, %32 : vector<1x128xf32>
    %c0_14 = arith.constant 0 : index
    %c0_15 = arith.constant 0 : index
    %34 = vector.load %arg5[%c0_14, %c0_15] : memref<1x128xf32, #tpu.memory_space<vmem>>, vector<1x128xf32>
    tpu.vector_store %arg5[%c0_14, %c0_15], %33 {strides = array<i32>} : memref<1x128xf32, #tpu.memory_space<vmem>>, vector<1x128xf32>,
    %c0_i32_16 = arith.constant 0 : i32
    %35 = arith.cmpi eq, %arg0, %c0_i32_16 : i32
    %36 = arith.extui %35 : i1 to i32
    %c0_i32_17 = arith.constant 0 : i32
    %37 = arith.cmpi ne, %36, %c0_i32_17 : i32
    scf.if %37 {
      %c0_18 = arith.constant 0 : index
      %c0_19 = arith.constant 0 : index
      %38 = vector.load %arg4[%c0_18, %c0_19] : memref<1x128xf32, #tpu.memory_space<vmem>>, vector<1x128xf32>
      %39 = vector.shape_cast %38 : vector<1x128xf32> to vector<1x1x128xf32>
      %cst_20 = arith.constant dense<0.000000e+00> : vector<1xf32>
      %40 = vector.multi_reduction <add>, %39, %cst_20 [1, 2] : vector<1x1x128xf32> to vector<1xf32>
      %41 = vector.shape_cast %40 : vector<1xf32> to vector<1x1x1xf32>
      %42 = vector.extract %41[0, 0, 0] : f32 from vector<1x1x1xf32>
      %43 = vector.broadcast %42 : f32 to vector<1x128xf32>
      %44 = arith.divf %38, %43 : vector<1x128xf32>
      %cst_21 = arith.constant -0.0512932949 : f32
      %45 = vector.broadcast %cst_21 : f32 to vector<1x128xf32>
      %46 = arith.mulf %44, %45 : vector<1x128xf32>
      %47 = math.exp %46 : vector<1x128xf32>
      %cst_22 = arith.constant 1.000000e+00 : f32
      %48 = vector.broadcast %cst_22 : f32 to vector<1x128xf32>
      %49 = arith.subf %48, %47 : vector<1x128xf32>
      %cst_23 = arith.constant 5.000000e-02 : f32
      %50 = vector.broadcast %cst_23 : f32 to vector<1x128xf32>
      %51 = arith.divf %49, %50 : vector<1x128xf32>
      %52 = vector.shape_cast %51 : vector<1x128xf32> to vector<1x1x128xf32>
      %cst_24 = arith.constant dense<0.000000e+00> : vector<1xf32>
      %53 = vector.multi_reduction <add>, %52, %cst_24 [1, 2] : vector<1x1x128xf32> to vector<1xf32>
      %54 = vector.shape_cast %53 : vector<1xf32> to vector<1x1x1xf32>
      %55 = vector.extract %54[0, 0, 0] : f32 from vector<1x1x1xf32>
      %56 = vector.broadcast %55 : f32 to vector<1x128xf32>
      %57 = arith.divf %51, %56 : vector<1x128xf32>
      %c0_25 = arith.constant 0 : index
      %c0_26 = arith.constant 0 : index
      %58 = vector.load %arg5[%c0_25, %c0_26] : memref<1x128xf32, #tpu.memory_space<vmem>>, vector<1x128xf32>
      %59 = arith.mulf %57, %58 : vector<1x128xf32>
      %60 = vector.shape_cast %59 : vector<1x128xf32> to vector<1x1x128xf32>
      %cst_27 = arith.constant dense<0.000000e+00> : vector<1xf32>
      %61 = vector.multi_reduction <add>, %60, %cst_27 [1, 2] : vector<1x1x128xf32> to vector<1xf32>
      %62 = vector.shape_cast %61 : vector<1xf32> to vector<1x1x1xf32>
      %63 = vector.extract %62[0, 0, 0] : f32 from vector<1x1x1xf32>
      %64 = arith.mulf %57, %38 : vector<1x128xf32>
      %65 = vector.shape_cast %64 : vector<1x128xf32> to vector<1x1x128xf32>
      %cst_28 = arith.constant dense<0.000000e+00> : vector<1xf32>
      %66 = vector.multi_reduction <add>, %65, %cst_28 [1, 2] : vector<1x1x128xf32> to vector<1xf32>
      %67 = vector.shape_cast %66 : vector<1xf32> to vector<1x1x1xf32>
      %68 = vector.extract %67[0, 0, 0] : f32 from vector<1x1x1xf32>
      %69 = arith.divf %63, %68 : f32
      %c0_29 = arith.constant 0 : index
      %c0_30 = arith.constant 0 : index
      %70 = memref.load %arg3[%c0_29, %c0_30] : memref<1x1xf32, #tpu.memory_space<smem>>
      memref.store %69, %arg3[%c0_29, %c0_30] : memref<1x1xf32, #tpu.memory_space<smem>>
    } else {
    }
    return
  }
  func.func @transform_0(%arg0: i32) -> (i32, i32) {
    %c0_i32 = arith.constant 0 : i32
    %c0_i32_0 = arith.constant 0 : i32
    return %arg0, %c0_i32 : i32, i32
  }
  func.func @transform_1(%arg0: i32) -> (i32, i32) {
    %c0_i32 = arith.constant 0 : i32
    %c0_i32_0 = arith.constant 0 : i32
    return %arg0, %c0_i32 : i32, i32
  }
  func.func @transform_2(%arg0: i32) -> (i32, i32) {
    %c0_i32 = arith.constant 0 : i32
    %c0_i32_0 = arith.constant 0 : i32
    %c0_i32_1 = arith.constant 0 : i32
    return %c0_i32, %c0_i32_0 : i32, i32
  }
}

</mosaic_0001>

<llo_original>
// kernel: tpu_custom_call.1
$region0: #{tpu_custom_call.1}
  #allocation0 [shape = 'u32[]', space=smem, size = 0x4, offset = 0x4, fixed_abs, tag = 'smem constant byte address 0x4 - core index']
  #allocation1 [shape = 'u32[144,128]{1,0:T(1,128)}', space=vmem, size = 0x12000, scoped, tag = 'internal scratch']
  #allocation2 [shape = 'f32[1,128]{1,0:T(1,128)}', space=vmem, size = 0x200, scoped, tag = 'scratch operand']
  #allocation3 [shape = 'f32[1,128]{1,0:T(1,128)}', space=vmem, size = 0x200, scoped, tag = 'scratch operand']
  %s0 = inlined_call_operand.vmem [shape: f32[24,128], index: 0, kind: input, shape index: {}]
  %s1 = inlined_call_operand.vmem [shape: s32[24,1], index: 1, kind: input, shape index: {}]
  %s2 = inlined_call_operand.hbm [shape: f32[1,1], index: 2, kind: output, shape index: {}]
  %s3 = sld [smem:[#allocation0]]
  $region26: #{tpu_custom_call.1} parent=0
    _
  %s5 = ssub.s32 1, %s3
  %s6 = scalar_select 0, %s5, %s3
  $region1: #{tpu_custom_call.1} parent=0
    #allocation4 [shape = 'u8[512]{0}', space=smem, size = 0x200, scoped, tag = 'output window, operand 0, single buffered']
    #allocation5 [shape = 's32[1]{0}', space=sflag, size = 0x4, scoped, tag = 'scoped memory for tpu_custom_call.1']
    %7 = vsyncpa [#allocation5], 0
    // Predicated region
    $region2: #{tpu_custom_call.1} parent=1 // pred_check
      _
    $region3: #{tpu_custom_call.1} parent=1 // pred_check_branch
      %9 = sbr.rel (0) target = $region5
    $region4: #{tpu_custom_call.1} parent=1 // pred_region
      _
    $region5: #{tpu_custom_call.1} parent=1 // pred_fallthru
      _
    // Predicated region
    $region6: #{tpu_custom_call.1} parent=1 // pred_check
      _
    $region7: #{tpu_custom_call.1} parent=1 // pred_check_branch
      %11 = sbr.rel (0) target = $region9
    $region8: #{tpu_custom_call.1} parent=1 // pred_region
      _
    $region9: #{tpu_custom_call.1} parent=1 // pred_fallthru
      _
    %p12 = scmp.eq.s32.totalorder 0, 0
    // Predicated region
    $region10: #{tpu_custom_call.1} parent=1 // pred_check
      %p13 = pneg %p12
    $region11: #{tpu_custom_call.1} parent=1 // pred_check_branch
      %15 = sbr.rel (%p13) target = $region13
    $region12: #{tpu_custom_call.1} parent=1 // pred_region
      %16 = vst [vmem:[#allocation2] sm:$0x1] 0.0
      %17 = vst [vmem:[#allocation3] sm:$0x1] 0.0
    $region13: #{tpu_custom_call.1} parent=1 // pred_fallthru
      _
    %v18 = vld [vmem:[%s0] sm:$0xff]
    %v19 = vld [vmem:[%s0 + $0x8] sm:$0xff]
    %v20 = vld [vmem:[%s0 + $0x10] sm:$0xff]
    %v21 = vld [vmem:[%s1] sm:$0xff]
    %v22 = vld [vmem:[%s1 + $0x8] sm:$0xff]
    %v23 = vld [vmem:[%s1 + $0x10] sm:$0xff]
    %v24 = vlaneseq
    %v25 = vand.u32 %v24, 127
    %26 = vset.pattern.permute.xlu0 0
    %27 = vperm.xlu0 %26, %v21
    %v28 = vpop.permute.xlu0 %27
    %29 = vset.pattern.permute.xlu0 0
    %30 = vperm.xlu0 %29, %v22
    %v31 = vpop.permute.xlu0 %30
    %32 = vset.pattern.permute.xlu0 0
    %33 = vperm.xlu0 %32, %v23
    %v34 = vpop.permute.xlu0 %33
    %vm35 = vcmp.eq.s32.totalorder %v28, %v25
    %vm36 = vcmp.eq.s32.totalorder %v31, %v25
    %vm37 = vcmp.eq.s32.totalorder %v34, %v25
    %v38 = vsel %vm35, 1, 0
    %v39 = vsel %vm36, 1, 0
    %v40 = vsel %vm37, 1, 0
    %v41 = vcvt.s32.f32 %v38
    %v42 = vcvt.s32.f32 %v39
    %v43 = vcvt.s32.f32 %v40
    %44 = vmax.xlane.f32.xlu0 %v18
    %v45 = vpop.xlane.xlu0 %44
    %46 = vmax.xlane.f32.xlu0 %v19
    %v47 = vpop.xlane.xlu0 %46
    %48 = vmax.xlane.f32.xlu0 %v20
    %v49 = vpop.xlane.xlu0 %48
    %v50 = vsub.f32 %v18, %v45
    %v51 = vsub.f32 %v19, %v47
    %v52 = vsub.f32 %v20, %v49
    %v53 = vmul.f32 %v50, 1.442695
    %v54 = vpow.pop %v53
    %v55 = vmul.f32 %v51, 1.442695
    %v56 = vpow.pop %v55
    %v57 = vmul.f32 %v52, 1.442695
    %v58 = vpow.pop %v57
    %59 = vadd.xlane.f32.xlu0 %v54
    %v60 = vpop.xlane.xlu0 %59
    %61 = vadd.xlane.f32.xlu0 %v56
    %v62 = vpop.xlane.xlu0 %61
    %63 = vadd.xlane.f32.xlu0 %v58
    %v64 = vpop.xlane.xlu0 %63
    %v65 = vlog2.pop %v60
    %v66 = vmul.f32 %v65, 0.6931472
    %v67 = vlog2.pop %v62
    %v68 = vmul.f32 %v67, 0.6931472
    %v69 = vlog2.pop %v64
    %v70 = vmul.f32 %v69, 0.6931472
    %v71 = vmul.f32 %v41, %v18
    %v72 = vmul.f32 %v42, %v19
    %v73 = vmul.f32 %v43, %v20
    %74 = vadd.xlane.f32.xlu0 %v71
    %v75 = vpop.xlane.xlu0 %74
    %76 = vadd.xlane.f32.xlu0 %v72
    %v77 = vpop.xlane.xlu0 %76
    %78 = vadd.xlane.f32.xlu0 %v73
    %v79 = vpop.xlane.xlu0 %78
    %v80 = vadd.f32 %v45, %v66
    %v81 = vadd.f32 %v47, %v68
    %v82 = vadd.f32 %v49, %v70
    %v83 = vsub.f32 %v80, %v75
    %v84 = vsub.f32 %v81, %v77
    %v85 = vsub.f32 %v82, %v79
    %v86 = vld [vmem:[#allocation2] sm:$0x1]
    %v87 = vadd.f32 %v41, %v42
    %v88 = vadd.f32 %v87, %v43
    %v89 = vrot.slane %v88, 4
    %v90 = vadd.f32 %v88, %v89
    %v91 = vrot.slane %v90, 2
    %v92 = vadd.f32 %v90, %v91
    %v93 = vrot.slane %v92, 1
    %v94 = vadd.f32 %v92, %v93
    %v95 = vadd.f32 %v86, %v94
    %96 = vst [vmem:[#allocation2] sm:$0x1] %v95
    %v97 = vld [vmem:[#allocation3] sm:$0x1]
    %v98 = vmul.f32 %v41, %v83
    %v99 = vmul.f32 %v42, %v84
    %v100 = vmul.f32 %v43, %v85
    %v101 = vadd.f32 %v98, %v99
    %v102 = vadd.f32 %v101, %v100
    %v103 = vrot.slane %v102, 4
    %v104 = vadd.f32 %v102, %v103
    %v105 = vrot.slane %v104, 2
    %v106 = vadd.f32 %v104, %v105
    %v107 = vrot.slane %v106, 1
    %v108 = vadd.f32 %v106, %v107
    %v109 = vadd.f32 %v97, %v108
    %110 = vst [vmem:[#allocation3] sm:$0x1] %v109
    // Predicated region
    $region14: #{tpu_custom_call.1} parent=1 // pred_check
      %p111 = pneg %p12
    $region15: #{tpu_custom_call.1} parent=1 // pred_check_branch
      %113 = sbr.rel (%p111) target = $region17
    $region16: #{tpu_custom_call.1} parent=1 // pred_region
      %v114 = vld [vmem:[#allocation2] sm:$0x1]
      %vm115 = vcmask 1040384
      %v116 = vsel %vm115, %v114, 0.0
      %117 = vadd.xlane.f32.xlu0 %v116
      %v118 = vpop.xlane.xlu0 %117
      %v119 = vrot.slane %v118, 4
      %v120 = vadd.f32 %v118, %v119
      %v121 = vrot.slane %v120, 2
      %v122 = vadd.f32 %v120, %v121
      %v123 = vrot.slane %v122, 1
      %v124 = vadd.f32 %v122, %v123
      %s125 = vtos %v124
      %v126 = vstv %s125
      %v127 = vrcp.pop %v126
      %v128 = vmul.f32 %v114, %v127
      %v129 = vmul.f32 %v128, -0.051293295
      %v130 = vmul.f32 %v129, 1.442695
      %v131 = vpow.pop %v130
      %v132 = vsub.f32 1.0, %v131
      %v133 = vrcp.pop 0.05
      %v134 = vmul.f32 %v132, %v133
      %v135 = vsel %vm115, %v134, 0.0
      %136 = vadd.xlane.f32.xlu0 %v135
      %v137 = vpop.xlane.xlu0 %136
      %v138 = vrot.slane %v137, 4
      %v139 = vadd.f32 %v137, %v138
      %v140 = vrot.slane %v139, 2
      %v141 = vadd.f32 %v139, %v140
      %v142 = vrot.slane %v141, 1
      %v143 = vadd.f32 %v141, %v142
      %s144 = vtos %v143
      %v145 = vstv %s144
      %v146 = vrcp.pop %v145
      %v147 = vmul.f32 %v134, %v146
      %v148 = vld [vmem:[#allocation3] sm:$0x1]
      %v149 = vmul.f32 %v147, %v148
      %v150 = vsel %vm115, %v149, 0.0
      %151 = vadd.xlane.f32.xlu0 %v150
      %v152 = vpop.xlane.xlu0 %151
      %v153 = vrot.slane %v152, 4
      %v154 = vadd.f32 %v152, %v153
      %v155 = vrot.slane %v154, 2
      %v156 = vadd.f32 %v154, %v155
      %v157 = vrot.slane %v156, 1
      %v158 = vadd.f32 %v156, %v157
      %s159 = vtos %v158
      %v160 = vmul.f32 %v147, %v114
      %v161 = vsel %vm115, %v160, 0.0
      %162 = vadd.xlane.f32.xlu0 %v161
      %v163 = vpop.xlane.xlu0 %162
      %v164 = vrot.slane %v163, 4
      %v165 = vadd.f32 %v163, %v164
      %v166 = vrot.slane %v165, 2
      %v167 = vadd.f32 %v165, %v166
      %v168 = vrot.slane %v167, 1
      %v169 = vadd.f32 %v167, %v168
      %s170 = vtos %v169
      %v171 = vstv %s170
      %v172 = vrcp.pop %v171
      %s173 = vtos %v172
      %s174 = smul.f32 %s159, %s173
      %s175 = scalar_lea.smem [#allocation4], 0
      %176 = sst [smem:[%s175]] %s174
    $region17: #{tpu_custom_call.1} parent=1 // pred_fallthru
      _
    // Predicated region
    $region18: #{tpu_custom_call.1} parent=1 // pred_check
      _
    $region19: #{tpu_custom_call.1} parent=1 // pred_check_branch
      %178 = sbr.rel (0) target = $region21
    $region20: #{tpu_custom_call.1} parent=1 // pred_region
      %s180 = ssub.s32 16, 16
      %181 = vsyncadd [#allocation5], %s180
      %184 = dma.smem_to_hbm [#allocation4], 16, %s2, [#allocation5]
    $region21: #{tpu_custom_call.1} parent=1 // pred_fallthru
      _
    // Predicated region
    $region22: #{tpu_custom_call.1} parent=1 // pred_check
      _
    $region23: #{tpu_custom_call.1} parent=1 // pred_check_branch
      %186 = sbr.rel (0) target = $region25
    $region24: #{tpu_custom_call.1} parent=1 // pred_region
      %187 = dma.done [#allocation5], 16
    $region25: #{tpu_custom_call.1} parent=1 // pred_fallthru
      _
    %188 = sfence
    %189 = vsyncpa [#allocation5], 1

</llo_original>
